<compile_context>
chip_gen: v5e
topology: v5e:2x2
jax: 0.10.0
libtpu: 0.0.40
codegen_flags: <defaults>
</compile_context>

<pallas_src>
import math

import jax
import jax.numpy as jnp
from jax import lax
from jax.experimental import pallas as pl
from jax.experimental.pallas import tpu as pltpu


def _round_up(x, m):
    return (x + m - 1) // m * m


def _make_kernel(chunk, n_chunks):
    """Build the fused MLP kernel for a (tm = chunk * n_chunks)-row x tile."""

    def kernel(x_ref, w1_ref, b1_ref, w2_ref, b2_ref, w3_ref, b3_ref, o_ref):
        # Weights / biases have constant index_maps -> VMEM-resident; load once.
        w1 = w1_ref[...]
        b1 = b1_ref[...]
        w2 = w2_ref[...]
        b2 = b2_ref[...]
        w3 = w3_ref[...]
        b3 = b3_ref[...]

        def process(r):
            # In-kernel bf16 cast (x streams from HBM as f32 -- no wrapper pass).
            x = x_ref[pl.ds(r, chunk), :].astype(jnp.bfloat16)
            # fc1 + ReLU (f32 MXU accumulation).
            h1 = jnp.dot(x, w1, preferred_element_type=jnp.float32)
            h1 = jnp.maximum(h1 + b1, 0.0)
            # fc2 + ReLU.
            h2 = jnp.dot(h1.astype(jnp.bfloat16), w2,
                         preferred_element_type=jnp.float32)
            h2 = jnp.maximum(h2 + b2, 0.0)
            # fc3 + sigmoid, reformulated as (1,64).(chunk,64)^T -> (1,chunk):
            # lane-dense result/store, no N=1 MXU output column.
            logits = lax.dot_general(
                w3, h2.astype(jnp.bfloat16),
                dimension_numbers=(((1,), (1,)), ((), ())),
                preferred_element_type=jnp.float32)
            o_ref[:, pl.ds(r, chunk)] = jax.nn.sigmoid(logits + b3)

        if n_chunks == 1:
            process(0)
        else:
            # Chunked inner loop: the big DMA tile amortizes per-grid-step
            # overhead while per-chunk f32 activations stay vreg-friendly.
            def body(c, carry):
                process(pl.multiple_of(c * chunk, chunk))
                return carry

            lax.fori_loop(0, n_chunks, body, 0, unroll=(n_chunks <= 8))

    return kernel


def _choose_tile(B, D, block_m, vmem_budget_bytes, max_chunk):
    """Pick (tm, chunk): tm fits the VMEM budget, chunk divides tm."""
    assert block_m % 128 == 0 and max_chunk % 128 == 0 and max_chunk >= 128
    bp = _round_up(B, 128)
    tm = min(block_m, bp)
    # >= 2 grid tiles when the batch allows it so v7x's two TCs both get work.
    if bp >= 256:
        tm = min(tm, _round_up(bp // 2, 128))
    # VMEM fit: 2x-buffered f32 x tile + 2x-buffered output row + resident
    # weights/biases (2 buffers each) + per-chunk activation slabs.
    weight_bytes = (D * 128 + 128 * 64 + 64) * 2 + (128 + 64 + 1) * 4
    act_bytes = max_chunk * (128 + 64) * 6          # f32 + bf16 copies
    per_row = 2 * D * 4 + 2 * 4
    avail = max(vmem_budget_bytes - 2 * weight_bytes - act_bytes, per_row * 128)
    tm_fit = max(128, (avail // per_row) // 128 * 128)
    tm = max(128, min(tm, tm_fit))
    # Largest chunk <= max_chunk (multiple of 128) that divides tm.
    chunk = min(tm, max_chunk)
    while tm % chunk != 0:
        chunk -= 128
    return tm, chunk


def mlp_classifier_forward(x, params, *, block_m=4096, max_chunk=512,
                           vmem_budget_bytes=24 * 1024 * 1024):
    """x: (B, D) float32.  params: w1(D,128), b1(1,128), w2(128,64), b2(1,64),
    w3(64,1), b3(1,1)  (weights stored (in, out) = PyTorch weight.T)."""
    B, D = x.shape
    tm, chunk = _choose_tile(B, D, block_m, vmem_budget_bytes, max_chunk)
    n_chunks = tm // chunk
    num_tiles = pl.cdiv(B, tm)

    # Weights are tiny: cast once to bf16.  x stays f32 in HBM.
    w1 = params["w1"].astype(jnp.bfloat16)                   # (D, 128)
    w2 = params["w2"].astype(jnp.bfloat16)                   # (128, 64)
    w3r = params["w3"].reshape(1, -1).astype(jnp.bfloat16)   # (1, 64)
    b1, b2, b3 = params["b1"], params["b2"], params["b3"]    # f32 (1, out)

    # Constant index_map -> DMA'd once, VMEM-resident across the whole grid.
    # TODO(synk): pipeline_mode=pl.Buffered(1) would drop their second buffer;
    # omitted for portability -- their footprint is already in the VMEM budget.
    const = lambda shape: pl.BlockSpec(shape, lambda i: (0, 0))

    flops = 2 * B * (D * 128 + 128 * 64 + 64)
    bytes_accessed = (B * D * 4 + B * 4
                      + (D * 128 + 128 * 64 + 64) * 2 + (128 + 64 + 1) * 4)

    out_row = pl.pallas_call(
        _make_kernel(chunk, n_chunks),
        out_shape=jax.ShapeDtypeStruct((1, B), jnp.float32),
        grid=(num_tiles,),
        in_specs=[
            pl.BlockSpec((tm, D), lambda i: (i, 0)),   # x: streamed per tile (f32)
            const((D, 128)),                           # w1
            const((1, 128)),                           # b1
            const((128, 64)),                          # w2
            const((1, 64)),                            # b2
            const((1, 64)),                            # w3 (row form)
            const((1, 1)),                             # b3
        ],
        # Ragged tail: Pallas clips the trailing input DMA and masks the
        # partial output write -- no wrapper-side padding needed.
        out_specs=pl.BlockSpec((1, tm), lambda i: (0, i)),
        compiler_params=pltpu.CompilerParams(
            dimension_semantics=("parallel",),
            vmem_limit_bytes=32 * 1024 * 1024),
        cost_estimate=pl.CostEstimate(
            flops=flops, transcendentals=B, bytes_accessed=bytes_accessed),
    )(x.astype(jnp.float32), w1, b1, w2, b2, w3r, b3)

    return out_row[0, :].reshape(B, 1)


def init_params(key, input_dim):
    """Deterministic init mirroring nn.Linear's default U(-1/sqrt(fan_in), +)."""
    dims = [(input_dim, 128), (128, 64), (64, 1)]
    params = {}
    for i, (fan_in, fan_out) in enumerate(dims, start=1):
        key, kw, kb = jax.random.split(key, 3)
        bound = 1.0 / math.sqrt(fan_in)
        # stored as (in, out): PyTorch's (out, in) weight, transposed.
        params[f"w{i}"] = jax.random.uniform(
            kw, (fan_in, fan_out), jnp.float32, -bound, bound)
        params[f"b{i}"] = jax.random.uniform(
            kb, (1, fan_out), jnp.float32, -bound, bound)
    return params


def reference_forward_bf16(x, params):
    """Plain-JAX reference applying the same bf16 rounding as the kernel."""
    bf = jnp.bfloat16
    h = jnp.dot(x.astype(bf), params["w1"].astype(bf),
                preferred_element_type=jnp.float32) + params["b1"]
    h = jnp.maximum(h, 0.0)
    h = jnp.dot(h.astype(bf), params["w2"].astype(bf),
                preferred_element_type=jnp.float32) + params["b2"]
    h = jnp.maximum(h, 0.0)
    logits = jnp.dot(h.astype(bf), params["w3"].astype(bf),
                     preferred_element_type=jnp.float32) + params["b3"]
    return jax.nn.sigmoid(logits)


def reference_forward_f32(x, params):
    """Full-f32 reference matching the PyTorch MLPClassifier semantics."""
    h = jnp.maximum(x @ params["w1"] + params["b1"], 0.0)
    h = jnp.maximum(h @ params["w2"] + params["b2"], 0.0)
    return jax.nn.sigmoid(h @ params["w3"] + params["b3"])


if __name__ == "__main__":
    key = jax.random.PRNGKey(0)
    k_x, k_p, k_x2 = jax.random.split(key, 3)

    D = 32
    params = init_params(k_p, D)

    # Small single-tile, single-chunk case.
    B = 8
    x = jax.random.normal(k_x, (B, D), jnp.float32)
    out = jax.block_until_ready(mlp_classifier_forward(x, params))
    ref_bf = reference_forward_bf16(x, params)
    ref_f32 = reference_forward_f32(x, params)
    assert out.shape == (B, 1)
    assert jnp.allclose(out, ref_bf, atol=2e-3, rtol=2e-3)
    assert jnp.allclose(out, ref_f32, atol=2e-2, rtol=2e-2)  # bf16 vs true f32

    # Multi-tile + inner-chunk-loop + ragged-tail case (no wrapper padding).
    B2 = 300
    x2 = jax.random.normal(k_x2, (B2, D), jnp.float32)
    out2 = jax.block_until_ready(
        mlp_classifier_forward(x2, params, block_m=256, max_chunk=128))
    ref2_bf = reference_forward_bf16(x2, params)
    ref2_f32 = reference_forward_f32(x2, params)
    assert out2.shape == (B2, 1)
    assert jnp.allclose(out2, ref2_bf, atol=2e-3, rtol=2e-3)
    assert jnp.allclose(out2, ref2_f32, atol=2e-2, rtol=2e-2)

    print("KERNEL_OK")
</pallas_src>

<mosaic_0001>
module attributes {stable_mosaic.version = 11 : i64} {
  func.func @kernel(%arg0: i32, %arg1: memref<128x32xf32, #tpu.memory_space<vmem>>, %arg2: memref<32x128xbf16, #tpu.memory_space<vmem>>, %arg3: memref<1x128xf32, #tpu.memory_space<vmem>>, %arg4: memref<128x64xbf16, #tpu.memory_space<vmem>>, %arg5: memref<1x64xf32, #tpu.memory_space<vmem>>, %arg6: memref<1x64xbf16, #tpu.memory_space<vmem>>, %arg7: memref<1x1xf32, #tpu.memory_space<vmem>>, %arg8: memref<1x128xf32, #tpu.memory_space<vmem>>) attributes {dimension_semantics = [#tpu.dimension_semantics<parallel>], iteration_bounds = array<i64: 1>, scalar_prefetch = 0 : i64, scratch_operands = 0 : i64, tpu.core_type = #tpu.core_type<tc>, window_params = [{transform_indices = @transform_0, window_bounds = array<i64: 128, 32>}, {pipeline_mode = #tpu.pipeline_mode<synchronous>, transform_indices = @transform_1, window_bounds = array<i64: 32, 128>}, {pipeline_mode = #tpu.pipeline_mode<synchronous>, transform_indices = @transform_2, window_bounds = array<i64: 1, 128>}, {pipeline_mode = #tpu.pipeline_mode<synchronous>, transform_indices = @transform_3, window_bounds = array<i64: 128, 64>}, {pipeline_mode = #tpu.pipeline_mode<synchronous>, transform_indices = @transform_4, window_bounds = array<i64: 1, 64>}, {pipeline_mode = #tpu.pipeline_mode<synchronous>, transform_indices = @transform_5, window_bounds = array<i64: 1, 64>}, {pipeline_mode = #tpu.pipeline_mode<synchronous>, transform_indices = @transform_6, window_bounds = array<i64: 1, 1>}, {transform_indices = @transform_7, window_bounds = array<i64: 1, 128>}]} {
    %c0 = arith.constant 0 : index
    %c0_0 = arith.constant 0 : index
    %0 = vector.load %arg2[%c0, %c0_0] : memref<32x128xbf16, #tpu.memory_space<vmem>>, vector<32x128xbf16>
    %c0_1 = arith.constant 0 : index
    %c0_2 = arith.constant 0 : index
    %1 = vector.load %arg3[%c0_1, %c0_2] : memref<1x128xf32, #tpu.memory_space<vmem>>, vector<1x128xf32>
    %c0_3 = arith.constant 0 : index
    %c0_4 = arith.constant 0 : index
    %2 = vector.load %arg4[%c0_3, %c0_4] : memref<128x64xbf16, #tpu.memory_space<vmem>>, vector<128x64xbf16>
    %c0_5 = arith.constant 0 : index
    %c0_6 = arith.constant 0 : index
    %3 = vector.load %arg5[%c0_5, %c0_6] : memref<1x64xf32, #tpu.memory_space<vmem>>, vector<1x64xf32>
    %c0_7 = arith.constant 0 : index
    %c0_8 = arith.constant 0 : index
    %4 = vector.load %arg6[%c0_7, %c0_8] : memref<1x64xbf16, #tpu.memory_space<vmem>>, vector<1x64xbf16>
    %c0_9 = arith.constant 0 : index
    %c0_10 = arith.constant 0 : index
    %5 = vector.load %arg7[%c0_9, %c0_10] : memref<1x1xf32, #tpu.memory_space<vmem>>, vector<1x1xf32>
    %c0_11 = arith.constant 0 : index
    %c0_12 = arith.constant 0 : index
    %6 = vector.load %arg1[%c0_11, %c0_12] : memref<128x32xf32, #tpu.memory_space<vmem>>, vector<128x32xf32>
    %7 = arith.truncf %6 : vector<128x32xf32> to vector<128x32xbf16>
    %cst = arith.constant dense<0.000000e+00> : vector<128x128xf32>
    %8 = tpu.matmul %7, %0, %cst {dimension_numbers = #tpu.dot_dimension_numbers<[1], [0], [0], [1], [0, 0, 1, 1], [], []>} : vector<128x32xbf16>, vector<32x128xbf16>, vector<128x128xf32> -> vector<128x128xf32>
    %9 = vector.broadcast %1 : vector<1x128xf32> to vector<128x128xf32>
    %10 = arith.addf %8, %9 : vector<128x128xf32>
    %cst_13 = arith.constant 0.000000e+00 : f32
    %11 = vector.broadcast %cst_13 : f32 to vector<128x128xf32>
    %12 = arith.maximumf %10, %11 : vector<128x128xf32>
    %13 = arith.truncf %12 : vector<128x128xf32> to vector<128x128xbf16>
    %cst_14 = arith.constant dense<0.000000e+00> : vector<128x64xf32>
    %14 = tpu.matmul %13, %2, %cst_14 {dimension_numbers = #tpu.dot_dimension_numbers<[1], [0], [0], [1], [0, 0, 1, 1], [], []>} : vector<128x128xbf16>, vector<128x64xbf16>, vector<128x64xf32> -> vector<128x64xf32>
    %15 = vector.broadcast %3 : vector<1x64xf32> to vector<128x64xf32>
    %16 = arith.addf %14, %15 : vector<128x64xf32>
    %cst_15 = arith.constant 0.000000e+00 : f32
    %17 = vector.broadcast %cst_15 : f32 to vector<128x64xf32>
    %18 = arith.maximumf %16, %17 : vector<128x64xf32>
    %19 = arith.truncf %18 : vector<128x64xf32> to vector<128x64xbf16>
    %cst_16 = arith.constant dense<0.000000e+00> : vector<1x128xf32>
    %20 = tpu.matmul %4, %19, %cst_16 {dimension_numbers = #tpu.dot_dimension_numbers<[1], [1], [0], [0], [0, 0, 1, 0], [], []>} : vector<1x64xbf16>, vector<128x64xbf16>, vector<1x128xf32> -> vector<1x128xf32>
    %21 = vector.broadcast %5 : vector<1x1xf32> to vector<1x128xf32>
    %22 = arith.addf %20, %21 : vector<1x128xf32>
    %23 = arith.negf %22 : vector<1x128xf32>
    %24 = math.exp %23 : vector<1x128xf32>
    %cst_17 = arith.constant 1.000000e+00 : f32
    %25 = vector.broadcast %cst_17 : f32 to vector<1x128xf32>
    %26 = arith.addf %25, %24 : vector<1x128xf32>
    %27 = arith.divf %25, %26 : vector<1x128xf32>
    %c0_18 = arith.constant 0 : index
    %c0_19 = arith.constant 0 : index
    %28 = vector.load %arg8[%c0_18, %c0_19] : memref<1x128xf32, #tpu.memory_space<vmem>>, vector<1x128xf32>
    tpu.vector_store %arg8[%c0_18, %c0_19], %27 {strides = array<i32>} : memref<1x128xf32, #tpu.memory_space<vmem>>, vector<1x128xf32>,
    return
  }
  func.func @transform_0(%arg0: i32) -> (i32, i32) {
    %c0_i32 = arith.constant 0 : i32
    %c0_i32_0 = arith.constant 0 : i32
    return %arg0, %c0_i32 : i32, i32
  }
  func.func @transform_1(%arg0: i32) -> (i32, i32) {
    %c0_i32 = arith.constant 0 : i32
    %c0_i32_0 = arith.constant 0 : i32
    %c0_i32_1 = arith.constant 0 : i32
    return %c0_i32, %c0_i32_0 : i32, i32
  }
  func.func @transform_2(%arg0: i32) -> (i32, i32) {
    %c0_i32 = arith.constant 0 : i32
    %c0_i32_0 = arith.constant 0 : i32
    %c0_i32_1 = arith.constant 0 : i32
    return %c0_i32, %c0_i32_0 : i32, i32
  }
  func.func @transform_3(%arg0: i32) -> (i32, i32) {
    %c0_i32 = arith.constant 0 : i32
    %c0_i32_0 = arith.constant 0 : i32
    %c0_i32_1 = arith.constant 0 : i32
    return %c0_i32, %c0_i32_0 : i32, i32
  }
  func.func @transform_4(%arg0: i32) -> (i32, i32) {
    %c0_i32 = arith.constant 0 : i32
    %c0_i32_0 = arith.constant 0 : i32
    %c0_i32_1 = arith.constant 0 : i32
    return %c0_i32, %c0_i32_0 : i32, i32
  }
  func.func @transform_5(%arg0: i32) -> (i32, i32) {
    %c0_i32 = arith.constant 0 : i32
    %c0_i32_0 = arith.constant 0 : i32
    %c0_i32_1 = arith.constant 0 : i32
    return %c0_i32, %c0_i32_0 : i32, i32
  }
  func.func @transform_6(%arg0: i32) -> (i32, i32) {
    %c0_i32 = arith.constant 0 : i32
    %c0_i32_0 = arith.constant 0 : i32
    %c0_i32_1 = arith.constant 0 : i32
    return %c0_i32, %c0_i32_0 : i32, i32
  }
  func.func @transform_7(%arg0: i32) -> (i32, i32) {
    %c0_i32 = arith.constant 0 : i32
    %c0_i32_0 = arith.constant 0 : i32
    return %c0_i32, %arg0 : i32, i32
  }
}

</mosaic_0001>

<llo_original>
// kernel: tpu_custom_call.1
$region0: #{tpu_custom_call.1}
  #allocation0 [shape = 'u32[]', space=smem, size = 0x4, offset = 0x4, fixed_abs, tag = 'smem constant byte address 0x4 - core index']
  #allocation1 [shape = 'u32[72,128]{1,0:T(1,128)}', space=vmem, size = 0x9000, scoped, tag = 'internal scratch']
  #allocation2 [shape = 'f32[1,1]{1,0:T(1,128)S(1)}', space=vmem, size = 0x200, scoped, tag = 'scoped memory for tpu_custom_call.1']
  %s0 = inlined_call_operand.vmem [shape: f32[8,32], index: 0, kind: input, shape index: {}]
  %s1 = inlined_call_operand.vmem [shape: bf16[32,128], index: 1, kind: input, shape index: {}]
  %s2 = inlined_call_operand.vmem [shape: f32[1,128], index: 2, kind: input, shape index: {}]
  %s3 = inlined_call_operand.vmem [shape: bf16[128,64], index: 3, kind: input, shape index: {}]
  %s4 = inlined_call_operand.vmem [shape: f32[1,64], index: 4, kind: input, shape index: {}]
  %s5 = inlined_call_operand.vmem [shape: bf16[1,64], index: 5, kind: input, shape index: {}]
  %s6 = inlined_call_operand.<no memory space> [shape: f32[1,1], index: 6, kind: input, shape index: {}]
  %s7 = inlined_call_operand.hbm [shape: f32[1,8], index: 7, kind: output, shape index: {}]
  %s8 = sld [smem:[#allocation0]]
  $region38: #{tpu_custom_call.1} parent=0
    _
  %s10 = ssub.s32 1, %s8
  %s11 = scalar_select 0, %s10, %s8
  %v12 = vstv %s6
  %13 = vst [vmem:[#allocation2] sm:$0x1] %v12
  $region1: #{tpu_custom_call.1} parent=0
    #allocation3 [shape = 'u8[512]{0}', space=vmem, size = 0x400, scoped, tag = 'output window, operand 0, single buffered']
    #allocation4 [shape = 's32[1]{0}', space=sflag, size = 0x4, scoped, tag = 'scoped memory for tpu_custom_call.1']
    %14 = vsyncpa [#allocation4], 0
    // Predicated region
    $region2: #{tpu_custom_call.1} parent=1 // pred_check
      _
    $region3: #{tpu_custom_call.1} parent=1 // pred_check_branch
      %16 = sbr.rel (0) target = $region5
    $region4: #{tpu_custom_call.1} parent=1 // pred_region
      _
    $region5: #{tpu_custom_call.1} parent=1 // pred_fallthru
      _
    // Predicated region
    $region6: #{tpu_custom_call.1} parent=1 // pred_check
      _
    $region7: #{tpu_custom_call.1} parent=1 // pred_check_branch
      %18 = sbr.rel (0) target = $region9
    $region8: #{tpu_custom_call.1} parent=1 // pred_region
      _
    $region9: #{tpu_custom_call.1} parent=1 // pred_fallthru
      _
    // Predicated region
    $region10: #{tpu_custom_call.1} parent=1 // pred_check
      _
    $region11: #{tpu_custom_call.1} parent=1 // pred_check_branch
      %20 = sbr.rel (0) target = $region13
    $region12: #{tpu_custom_call.1} parent=1 // pred_region
      _
    $region13: #{tpu_custom_call.1} parent=1 // pred_fallthru
      _
    // Predicated region
    $region14: #{tpu_custom_call.1} parent=1 // pred_check
      _
    $region15: #{tpu_custom_call.1} parent=1 // pred_check_branch
      %22 = sbr.rel (0) target = $region17
    $region16: #{tpu_custom_call.1} parent=1 // pred_region
      _
    $region17: #{tpu_custom_call.1} parent=1 // pred_fallthru
      _
    // Predicated region
    $region18: #{tpu_custom_call.1} parent=1 // pred_check
      _
    $region19: #{tpu_custom_call.1} parent=1 // pred_check_branch
      %24 = sbr.rel (0) target = $region21
    $region20: #{tpu_custom_call.1} parent=1 // pred_region
      _
    $region21: #{tpu_custom_call.1} parent=1 // pred_fallthru
      _
    // Predicated region
    $region22: #{tpu_custom_call.1} parent=1 // pred_check
      _
    $region23: #{tpu_custom_call.1} parent=1 // pred_check_branch
      %26 = sbr.rel (0) target = $region25
    $region24: #{tpu_custom_call.1} parent=1 // pred_region
      _
    $region25: #{tpu_custom_call.1} parent=1 // pred_fallthru
      _
    // Predicated region
    $region26: #{tpu_custom_call.1} parent=1 // pred_check
      _
    $region27: #{tpu_custom_call.1} parent=1 // pred_check_branch
      %28 = sbr.rel (0) target = $region29
    $region28: #{tpu_custom_call.1} parent=1 // pred_region
      _
    $region29: #{tpu_custom_call.1} parent=1 // pred_fallthru
      _
    %v30 = vld [vmem:[%s1] sm:$0xf]
    %v31 = vld [vmem:[%s1 + $0x4] sm:$0xf]
    %v32 = vld [vmem:[%s1 + $0x8] sm:$0xf]
    %v33 = vld [vmem:[%s1 + $0xc] sm:$0xf]
    %v34 = vld [vmem:[%s2] sm:$0x1]
    %v35 = vld [vmem:[%s3] sm:$0xf]
    %v36 = vld [vmem:[%s3 + $0x4] sm:$0xf]
    %v37 = vld [vmem:[%s3 + $0x8] sm:$0xf]
    %v38 = vld [vmem:[%s3 + $0xc] sm:$0xf]
    %v39 = vld [vmem:[%s3 + $0x10] sm:$0xf]
    %v40 = vld [vmem:[%s3 + $0x14] sm:$0xf]
    %v41 = vld [vmem:[%s3 + $0x18] sm:$0xf]
    %v42 = vld [vmem:[%s3 + $0x1c] sm:$0xf]
    %v43 = vld [vmem:[%s3 + $0x20] sm:$0xf]
    %v44 = vld [vmem:[%s3 + $0x24] sm:$0xf]
    %v45 = vld [vmem:[%s3 + $0x28] sm:$0xf]
    %v46 = vld [vmem:[%s3 + $0x2c] sm:$0xf]
    %v47 = vld [vmem:[%s3 + $0x30] sm:$0xf]
    %v48 = vld [vmem:[%s3 + $0x34] sm:$0xf]
    %v49 = vld [vmem:[%s3 + $0x38] sm:$0xf]
    %v50 = vld [vmem:[%s3 + $0x3c] sm:$0xf]
    %v51 = vld [vmem:[%s4] sm:$0x1]
    %v52 = vld [vmem:[%s5] sm:$0x1]
    %v53 = vld [vmem:[#allocation2] sm:$0x1]
    %v54 = vld [vmem:[%s0] sm:$0xff]
    %v55 = vld [vmem:[%s0 + $0x8] sm:$0xff]
    %v56 = vld [vmem:[%s0 + $0x10] sm:$0xff]
    %v57 = vld [vmem:[%s0 + $0x18] sm:$0xff]
    %v58 = vld [vmem:[%s0 + $0x20] sm:$0xff]
    %v59 = vld [vmem:[%s0 + $0x28] sm:$0xff]
    %v60 = vld [vmem:[%s0 + $0x30] sm:$0xff]
    %v61 = vld [vmem:[%s0 + $0x38] sm:$0xff]
    %v62 = vld [vmem:[%s0 + $0x40] sm:$0xff]
    %v63 = vld [vmem:[%s0 + $0x48] sm:$0xff]
    %v64 = vld [vmem:[%s0 + $0x50] sm:$0xff]
    %v65 = vld [vmem:[%s0 + $0x58] sm:$0xff]
    %v66 = vld [vmem:[%s0 + $0x60] sm:$0xff]
    %v67 = vld [vmem:[%s0 + $0x68] sm:$0xff]
    %v68 = vld [vmem:[%s0 + $0x70] sm:$0xff]
    %v69 = vld [vmem:[%s0 + $0x78] sm:$0xff]
    %v70 = vpack.c.bf16 %v55, %v54
    %v71 = vpack.c.bf16 %v57, %v56
    %v72 = vpack.c.bf16 %v59, %v58
    %v73 = vpack.c.bf16 %v61, %v60
    %v74 = vpack.c.bf16 %v63, %v62
    %v75 = vpack.c.bf16 %v65, %v64
    %v76 = vpack.c.bf16 %v67, %v66
    %v77 = vpack.c.bf16 %v69, %v68
    %v79 = vperm.slane %v34, 0
    %v85 = vunpack.c.l.b16 %v30
    %v86 = vunpack.c.l.b16 %v31
    %v87 = vunpack.c.l.b16 %v32
    %v88 = vunpack.c.l.b16 %v33
    %v89 = vpack.c.b16 %v86, %v85
    %v90 = vpack.c.b16 %v88, %v87
    %vm93 = vcmask 261120
    %v95 = vsel %vm93, %v70, 0
    %v98 = vsel %vm93, %v71, 0
    %v101 = vsel %vm93, %v72, 0
    %v104 = vsel %vm93, %v73, 0
    %v107 = vsel %vm93, %v74, 0
    %v110 = vsel %vm93, %v75, 0
    %v113 = vsel %vm93, %v76, 0
    %v116 = vsel %vm93, %v77, 0
    %118 = vmatpush.bf16.msra.mxu0 0
    %119 = vmatpush.bf16.msra.mxu0 0
    %120 = vmatpush.bf16.msra.mxu0 0
    %121 = vmatpush.bf16.msra.mxu0 0
    %122 = vmatpush.bf16.msra.mxu0 0
    %123 = vmatpush.bf16.msra.mxu0 0
    %124 = vmatpush.bf16.msra.mxu0 %v90
    %125 = vmatpush.bf16.msra.mxu0 %v89
    %126 = vmatmul.bf16.gmra.mxu0 %v95
    %v127 = vpop.f32.mrf.mxu0
    %v128 = vadd.f32 %v79, %v127
    %v129 = vpop.f32.mrf.mxu0
    %v130 = vadd.f32 %v79, %v129
    %131 = vmatmul.bf16.gmra.mxu0 %v98
    %v132 = vpop.f32.mrf.mxu0
    %v133 = vadd.f32 %v79, %v132
    %v134 = vpop.f32.mrf.mxu0
    %v135 = vadd.f32 %v79, %v134
    %136 = vmatmul.bf16.gmra.mxu0 %v101
    %v137 = vpop.f32.mrf.mxu0
    %v138 = vadd.f32 %v79, %v137
    %v139 = vpop.f32.mrf.mxu0
    %v140 = vadd.f32 %v79, %v139
    %141 = vmatmul.bf16.gmra.mxu0 %v104
    %v142 = vpop.f32.mrf.mxu0
    %v143 = vadd.f32 %v79, %v142
    %v144 = vpop.f32.mrf.mxu0
    %v145 = vadd.f32 %v79, %v144
    %146 = vmatmul.bf16.gmra.mxu0 %v107
    %v147 = vpop.f32.mrf.mxu0
    %v148 = vadd.f32 %v79, %v147
    %v149 = vpop.f32.mrf.mxu0
    %v150 = vadd.f32 %v79, %v149
    %151 = vmatmul.bf16.gmra.mxu0 %v110
    %v152 = vpop.f32.mrf.mxu0
    %v153 = vadd.f32 %v79, %v152
    %v154 = vpop.f32.mrf.mxu0
    %v155 = vadd.f32 %v79, %v154
    %156 = vmatmul.bf16.gmra.mxu0 %v113
    %v157 = vpop.f32.mrf.mxu0
    %v158 = vadd.f32 %v79, %v157
    %v159 = vpop.f32.mrf.mxu0
    %v160 = vadd.f32 %v79, %v159
    %161 = vmatmul.bf16.gmra.mxu0 %v116
    %v162 = vpop.f32.mrf.mxu0
    %v163 = vadd.f32 %v79, %v162
    %v164 = vpop.f32.mrf.mxu0
    %v165 = vadd.f32 %v79, %v164
    %166 = vdwg.mxu0
    %v167 = vmax.f32 %v128, 0.0
    %v168 = vmax.f32 %v130, 0.0
    %v169 = vmax.f32 %v133, 0.0
    %v170 = vmax.f32 %v135, 0.0
    %v171 = vmax.f32 %v138, 0.0
    %v172 = vmax.f32 %v140, 0.0
    %v173 = vmax.f32 %v143, 0.0
    %v174 = vmax.f32 %v145, 0.0
    %v175 = vmax.f32 %v148, 0.0
    %v176 = vmax.f32 %v150, 0.0
    %v177 = vmax.f32 %v153, 0.0
    %v178 = vmax.f32 %v155, 0.0
    %v179 = vmax.f32 %v158, 0.0
    %v180 = vmax.f32 %v160, 0.0
    %v181 = vmax.f32 %v163, 0.0
    %v182 = vmax.f32 %v165, 0.0
    %v183 = vpack.c.bf16 %v168, %v167
    %v184 = vpack.c.bf16 %v170, %v169
    %v185 = vpack.c.bf16 %v172, %v171
    %v186 = vpack.c.bf16 %v174, %v173
    %v187 = vpack.c.bf16 %v176, %v175
    %v188 = vpack.c.bf16 %v178, %v177
    %v189 = vpack.c.bf16 %v180, %v179
    %v190 = vpack.c.bf16 %v182, %v181
    %v192 = vperm.slane %v51, 0
    %v210 = vunpack.c.l.b16 %v35
    %v211 = vunpack.c.l.b16 %v36
    %v212 = vunpack.c.l.b16 %v37
    %v213 = vunpack.c.l.b16 %v38
    %v214 = vunpack.c.l.b16 %v39
    %v215 = vunpack.c.l.b16 %v40
    %v216 = vunpack.c.l.b16 %v41
    %v217 = vunpack.c.l.b16 %v42
    %v218 = vunpack.c.l.b16 %v43
    %v219 = vunpack.c.l.b16 %v44
    %v220 = vunpack.c.l.b16 %v45
    %v221 = vunpack.c.l.b16 %v46
    %v222 = vunpack.c.l.b16 %v47
    %v223 = vunpack.c.l.b16 %v48
    %v224 = vunpack.c.l.b16 %v49
    %v225 = vunpack.c.l.b16 %v50
    %v226 = vpack.c.b16 %v211, %v210
    %v227 = vpack.c.b16 %v213, %v212
    %v228 = vpack.c.b16 %v215, %v214
    %v229 = vpack.c.b16 %v217, %v216
    %v230 = vpack.c.b16 %v219, %v218
    %v231 = vpack.c.b16 %v221, %v220
    %v232 = vpack.c.b16 %v223, %v222
    %v233 = vpack.c.b16 %v225, %v224
    %242 = vmatpush.bf16.msra.mxu0 %v233
    %243 = vmatpush.bf16.msra.mxu0 %v232
    %244 = vmatpush.bf16.msra.mxu0 %v231
    %245 = vmatpush.bf16.msra.mxu0 %v230
    %246 = vmatpush.bf16.msra.mxu0 %v229
    %247 = vmatpush.bf16.msra.mxu0 %v228
    %248 = vmatpush.bf16.msra.mxu0 %v227
    %249 = vmatpush.bf16.msra.mxu0 %v226
    %250 = vmatmul.bf16.gmra.mxu0 %v183
    %v251 = vpop.f32.mrf.mxu0
    %v252 = vadd.f32 %v192, %v251
    %v253 = vpop.f32.mrf.mxu0
    %v254 = vadd.f32 %v192, %v253
    %255 = vmatmul.bf16.gmra.mxu0 %v184
    %v256 = vpop.f32.mrf.mxu0
    %v257 = vadd.f32 %v192, %v256
    %v258 = vpop.f32.mrf.mxu0
    %v259 = vadd.f32 %v192, %v258
    %260 = vmatmul.bf16.gmra.mxu0 %v185
    %v261 = vpop.f32.mrf.mxu0
    %v262 = vadd.f32 %v192, %v261
    %v263 = vpop.f32.mrf.mxu0
    %v264 = vadd.f32 %v192, %v263
    %265 = vmatmul.bf16.gmra.mxu0 %v186
    %v266 = vpop.f32.mrf.mxu0
    %v267 = vadd.f32 %v192, %v266
    %v268 = vpop.f32.mrf.mxu0
    %v269 = vadd.f32 %v192, %v268
    %270 = vmatmul.bf16.gmra.mxu0 %v187
    %v271 = vpop.f32.mrf.mxu0
    %v272 = vadd.f32 %v192, %v271
    %v273 = vpop.f32.mrf.mxu0
    %v274 = vadd.f32 %v192, %v273
    %275 = vmatmul.bf16.gmra.mxu0 %v188
    %v276 = vpop.f32.mrf.mxu0
    %v277 = vadd.f32 %v192, %v276
    %v278 = vpop.f32.mrf.mxu0
    %v279 = vadd.f32 %v192, %v278
    %280 = vmatmul.bf16.gmra.mxu0 %v189
    %v281 = vpop.f32.mrf.mxu0
    %v282 = vadd.f32 %v192, %v281
    %v283 = vpop.f32.mrf.mxu0
    %v284 = vadd.f32 %v192, %v283
    %285 = vmatmul.bf16.gmra.mxu0 %v190
    %v286 = vpop.f32.mrf.mxu0
    %v287 = vadd.f32 %v192, %v286
    %v288 = vpop.f32.mrf.mxu0
    %v289 = vadd.f32 %v192, %v288
    %290 = vdwg.mxu0
    %v291 = vmax.f32 %v252, 0.0
    %v292 = vmax.f32 %v254, 0.0
    %v293 = vmax.f32 %v257, 0.0
    %v294 = vmax.f32 %v259, 0.0
    %v295 = vmax.f32 %v262, 0.0
    %v296 = vmax.f32 %v264, 0.0
    %v297 = vmax.f32 %v267, 0.0
    %v298 = vmax.f32 %v269, 0.0
    %v299 = vmax.f32 %v272, 0.0
    %v300 = vmax.f32 %v274, 0.0
    %v301 = vmax.f32 %v277, 0.0
    %v302 = vmax.f32 %v279, 0.0
    %v303 = vmax.f32 %v282, 0.0
    %v304 = vmax.f32 %v284, 0.0
    %v305 = vmax.f32 %v287, 0.0
    %v306 = vmax.f32 %v289, 0.0
    %v307 = vpack.c.bf16 %v292, %v291
    %v308 = vpack.c.bf16 %v294, %v293
    %v309 = vpack.c.bf16 %v296, %v295
    %v310 = vpack.c.bf16 %v298, %v297
    %v311 = vpack.c.bf16 %v300, %v299
    %v312 = vpack.c.bf16 %v302, %v301
    %v313 = vpack.c.bf16 %v304, %v303
    %v314 = vpack.c.bf16 %v306, %v305
    %316 = vset.pattern.permute.xlu0 0
    %317 = vperm.xlu0 %316, %v53
    %v318 = vpop.permute.xlu0 %317
    %v320 = vperm.slane %v318, 0
    %vm321 = vcmask 523264
    %v323 = vsel %vm321, %v52, 0
    %v326 = vsel %vm321, %v307, 0
    %v329 = vsel %vm321, %v308, 0
    %v332 = vsel %vm321, %v309, 0
    %v335 = vsel %vm321, %v310, 0
    %v338 = vsel %vm321, %v311, 0
    %v341 = vsel %vm321, %v312, 0
    %v344 = vsel %vm321, %v313, 0
    %v347 = vsel %vm321, %v314, 0
    %349 = vmatpush.bf16.xpose.msra.mxu0 %v347
    %350 = vmatpush.bf16.xpose.msra.mxu0 %v344
    %351 = vmatpush.bf16.xpose.msra.mxu0 %v341
    %352 = vmatpush.bf16.xpose.msra.mxu0 %v338
    %353 = vmatpush.bf16.xpose.msra.mxu0 %v335
    %354 = vmatpush.bf16.xpose.msra.mxu0 %v332
    %355 = vmatpush.bf16.xpose.msra.mxu0 %v329
    %356 = vmatpush.bf16.xpose.msra.mxu0 %v326
    %357 = vmatmul.bf16.gmra.mxu0 %v323
    %v358 = vpop.f32.mrf.mxu0
    %v359 = vadd.f32 %v320, %v358
    %v360 = vpop.f32.mrf.mxu0
    %361 = vdwg.mxu0
    %v362 = vxor.u32 %v359, 2147483648
    %v363 = vmul.f32 %v362, 1.442695
    %v364 = vpow.pop %v363
    %v365 = vadd.f32 %v364, 1.0
    %v366 = vrcp.pop %v365
    %v367 = vmul.f32 %v365, %v366
    %v368 = vsub.f32 1.0, %v367
    %v369 = vmul.f32 %v366, %v368
    %v370 = vadd.f32 %v366, %v369
    %vm371 = vweird.f32 %v365
    %vm372 = vweird.f32 %v366
    %vm373 = vmor %vm371, %vm372
    %v374 = vsel %vm373, %v366, %v370
    %v375 = vand.u32 2147483647, %v365
    %vm376 = vcmp.eq.f32.partialorder %v375, 8.507059e+37
    %v377 = vand.u32 %v365, 2147483648
    %v378 = vor.u32 1.1754944e-38, %v377
    %v379 = vsel %vm376, %v378, %v374
    %v380 = vmul.f32 1.0, %v379
    %381 = vst [vmem:[#allocation3] sm:$0x1] %v380
    // Predicated region
    $region30: #{tpu_custom_call.1} parent=1 // pred_check
      _
    $region31: #{tpu_custom_call.1} parent=1 // pred_check_branch
      %383 = sbr.rel (0) target = $region33
    $region32: #{tpu_custom_call.1} parent=1 // pred_region
      %385 = vsyncadd [#allocation4], 0
      %s387 = sshll.u32 [#allocation3], 4
      %s388 = int_to_ptr.vmem [resolvable:$true] %s387
      %s389 = sshll.u32 %s7, 4
      %s390 = int_to_ptr.hbm [resolvable:$true] %s389
      %392 = dma.vmem_to_hbm [thread:$0]  %s388, 16, %s390, [#allocation4]
    $region33: #{tpu_custom_call.1} parent=1 // pred_fallthru
      _
    // Predicated region
    $region34: #{tpu_custom_call.1} parent=1 // pred_check
      _
    $region35: #{tpu_custom_call.1} parent=1 // pred_check_branch
      %394 = sbr.rel (0) target = $region37
    $region36: #{tpu_custom_call.1} parent=1 // pred_region
      %396 = dma.done [#allocation4], 16
    $region37: #{tpu_custom_call.1} parent=1 // pred_fallthru
      _
    %397 = vsyncpa [#allocation4], 1

</llo_original>
